<compile_context>
chip_gen: v7x
topology: tpu7x:2x2x1
jax: 0.10.0
libtpu: 0.0.40
codegen_flags: <defaults>
</compile_context>

<pallas_src>
import math
from functools import partial

import jax
import jax.numpy as jnp
from jax.experimental import pallas as pl
from jax.experimental.pallas import tpu as pltpu


_SUBLANE_GRAN = {4: 8, 2: 16, 1: 32}   # rows per packed vreg by itemsize


def make_pos_embedding(emb_size: int, maxlen: int = 5000) -> jnp.ndarray:
    """Deterministic sinusoidal table, shape (maxlen, 1, emb_size), float32."""
    den = jnp.exp(-jnp.arange(0, emb_size, 2, dtype=jnp.float32)
                  * (math.log(10000.0) / emb_size))
    pos = jnp.arange(0, maxlen, dtype=jnp.float32).reshape(maxlen, 1)
    angles = pos * den                                    # (maxlen, emb_size//2)
    pe = jnp.zeros((maxlen, emb_size), dtype=jnp.float32)
    pe = pe.at[:, 0::2].set(jnp.sin(angles))
    pe = pe.at[:, 1::2].set(jnp.cos(angles))
    return pe[:, None, :]                                 # (maxlen, 1, emb_size)


# ------------------------- Pallas kernels -------------------------

def _pe_add_kernel(x_ref, pe_ref, o_ref, *, scale: float, batch: int,
                   compute_dtype):
    # x_ref/o_ref: (tile_s, B*E) -- sublane-dense rows, lane-dense columns.
    # pe_ref:      (tile_s, E)   -- one PE row per sequence position.
    x = x_ref[...].astype(compute_dtype)
    pe = pe_ref[...].astype(compute_dtype)
    if batch > 1:
        # Replicate the PE row across the batch segments of the lane axis.
        # For E a multiple of 128 this is pure vreg copies.
        pe = jnp.concatenate([pe] * batch, axis=-1)       # (tile_s, B*E)
    if scale != 1.0:
        y = x * jnp.asarray(scale, compute_dtype) + pe
    else:
        y = x + pe
    o_ref[...] = y.astype(o_ref.dtype)


def _pe_add_dropout_kernel(seed_ref, x_ref, pe_ref, o_ref, *, scale: float,
                           batch: int, keep_threshold: int,
                           inv_keep_prob: float, compute_dtype):
    # Mix the tile id into the seed (golden-ratio multiply, wraps in int32) so
    # tiles draw decorrelated streams instead of adjacent integer seeds.
    pltpu.prng_seed(seed_ref[0] ^ (pl.program_id(0) * jnp.int32(-1640531527)))
    x = x_ref[...].astype(compute_dtype)
    pe = pe_ref[...].astype(compute_dtype)
    if batch > 1:
        pe = jnp.concatenate([pe] * batch, axis=-1)
    if scale != 1.0:
        y = x * jnp.asarray(scale, compute_dtype) + pe
    else:
        y = x + pe
    bits = pltpu.bitcast(pltpu.prng_random_bits(y.shape), jnp.uint32)
    # keep_threshold = round(keep_prob * 2^32) clamped to 2^32-1; the resulting
    # keep-probability bias is at most 2^-32 (negligible).
    keep = bits < jnp.uint32(keep_threshold)
    o_ref[...] = jnp.where(keep, y * jnp.asarray(inv_keep_prob, compute_dtype),
                           jnp.zeros_like(y)).astype(o_ref.dtype)


# ------------------------- Sizing helpers -------------------------

def _round_up(x: int, m: int) -> int:
    return ((x + m - 1) // m) * m


def _round_down(x: int, m: int) -> int:
    return (x // m) * m


def _physical_vmem_bytes() -> int:
    try:
        return int(pltpu.get_tpu_info().vmem_capacity_bytes)
    except Exception:
        return 64 * 1024 * 1024        # v7x per-TC: smallest of v5e/v6e/v7x


def _default_compute_dtype(x_dtype):
    # bf16 VALU exists on v6e/v7x; v5e and older must compute in f32.
    if x_dtype == jnp.bfloat16:
        try:
            kind = jax.devices()[0].device_kind.lower()
        except Exception:
            kind = ""
        if ("v6" in kind) or ("v7" in kind):
            return jnp.bfloat16
    return jnp.float32


def _pick_tile_s(S: int, B: int, E: int, x_itemsize: int,
                 pe_itemsize: int) -> int:
    """S-tile sized from physical VMEM with padded footprint accounted for."""
    gran = _SUBLANE_GRAN.get(x_itemsize, 8)
    if S <= gran:
        return S                       # single full block (block dim == array dim)
    phys = _physical_vmem_bytes()
    budget = max(8 << 20, min(phys // 4, 32 << 20))
    lanes_x = _round_up(B * E, 128)
    lanes_pe = _round_up(E, 128)
    # Double-buffered x-in + out tiles, plus the double-buffered PE tile.
    bytes_per_row = 4 * lanes_x * x_itemsize + 2 * lanes_pe * pe_itemsize
    rows = max(gran, _round_down(budget // bytes_per_row, gran))
    # Keep >= 2 grid blocks so ("parallel",) can shard rows across v7x's two
    # TensorCores (neutral on single-TC v5e/v6e).
    if S >= 2 * gran:
        rows = min(rows, max(gran, _round_down(-(-S // 2), gran)))
    return min(rows, S)


def _vmem_limit_bytes(tile_s: int, B: int, E: int, x_itemsize: int,
                      pe_itemsize: int) -> int:
    gran = _SUBLANE_GRAN.get(x_itemsize, 8)
    rows = _round_up(tile_s, gran)
    lanes_x = _round_up(B * E, 128)
    lanes_pe = _round_up(E, 128)
    footprint = rows * (4 * lanes_x * x_itemsize + 2 * lanes_pe * pe_itemsize)
    phys = _physical_vmem_bytes()
    return int(min(phys, max(32 << 20, footprint + (4 << 20))))


# ------------------------- Wrapper -------------------------

def positional_encoding(token_embedding: jnp.ndarray,
                        pos_embedding: jnp.ndarray,
                        *,
                        dropout_rate: float = 0.1,
                        training: bool = False,
                        seed: int = 0,
                        emb_scale: float = 1.0,
                        tile_s: int | None = None,
                        donate_input: bool = False,
                        compute_dtype=None) -> jnp.ndarray:
    """
    token_embedding: (S, B, E)        float32 or bfloat16
    pos_embedding:   (maxlen, 1, E)   float32
    emb_scale: optional fused TokenEmbedding scale (sqrt(E) in the PyTorch model).
    Returns (S, B, E) in token_embedding.dtype.
    """
    S, B, E = token_embedding.shape
    if compute_dtype is None:
        compute_dtype = _default_compute_dtype(token_embedding.dtype)
    compute_dtype = jnp.dtype(compute_dtype)

    # Flatten (S, B, E) -> (S, B*E): free reshape on contiguous row-major data.
    x2 = token_embedding.reshape(S, B * E)
    pe_slice = pos_embedding[:S, 0, :].astype(compute_dtype)     # (S, E)

    x_itemsize = token_embedding.dtype.itemsize
    pe_itemsize = compute_dtype.itemsize

    if tile_s is None:
        tile_s = _pick_tile_s(S, B, E, x_itemsize, pe_itemsize)
    tile_s = max(1, min(int(tile_s), S))
    grid = (pl.cdiv(S, tile_s),)

    x_spec = pl.BlockSpec((tile_s, B * E), lambda i: (i, 0))
    pe_spec = pl.BlockSpec((tile_s, E), lambda i: (i, 0))
    o_spec = pl.BlockSpec((tile_s, B * E), lambda i: (i, 0))
    out_shape = jax.ShapeDtypeStruct((S, B * E), token_embedding.dtype)
    cparams = pltpu.CompilerParams(
        dimension_semantics=("parallel",),
        vmem_limit_bytes=_vmem_limit_bytes(tile_s, B, E, x_itemsize, pe_itemsize),
    )
    # NOTE: pipeline_mode=pl.Buffered(3) on x_spec is an option for very small
    # forced tiles; omitted here since auto tiles are sized to hide DMA already.

    if training and dropout_rate > 0.0:
        keep_prob = 1.0 - float(dropout_rate)
        keep_threshold = min(int(round(keep_prob * 2.0 ** 32)), 2 ** 32 - 1)
        seed_arr = jnp.asarray([seed], dtype=jnp.int32)
        out2 = pl.pallas_call(
            partial(_pe_add_dropout_kernel,
                    scale=float(emb_scale), batch=B,
                    keep_threshold=keep_threshold,
                    inv_keep_prob=1.0 / keep_prob,
                    compute_dtype=compute_dtype),
            grid=grid,
            out_shape=out_shape,
            in_specs=[pl.BlockSpec(memory_space=pltpu.MemorySpace.SMEM),
                      x_spec, pe_spec],
            out_specs=o_spec,
            compiler_params=cparams,
            input_output_aliases={1: 0} if donate_input else {},
        )(seed_arr, x2, pe_slice)
    else:
        # Eval mode: dropout is identity (matches nn.Dropout in .eval()).
        out2 = pl.pallas_call(
            partial(_pe_add_kernel, scale=float(emb_scale), batch=B,
                    compute_dtype=compute_dtype),
            grid=grid,
            out_shape=out_shape,
            in_specs=[x_spec, pe_spec],
            out_specs=o_spec,
            compiler_params=cparams,
            input_output_aliases={0: 0} if donate_input else {},
        )(x2, pe_slice)

    return out2.reshape(S, B, E)


if __name__ == "__main__":
    # Small shapes consistent with the module: seq=16, batch=2, emb_size=32.
    S, B, E = 16, 2, 32
    MAXLEN = 64

    key = jax.random.PRNGKey(0)
    token_embedding = jax.random.normal(key, (S, B, E), dtype=jnp.float32)
    pos_embedding = make_pos_embedding(E, MAXLEN)
    ref = token_embedding + pos_embedding[:S]

    # 1) Eval-mode forward (dropout == identity), auto tile (-> grid=(2,) here).
    out = jax.block_until_ready(
        positional_encoding(token_embedding, pos_embedding,
                            dropout_rate=0.1, training=False))
    assert out.shape == (S, B, E)
    assert jnp.allclose(out, ref, atol=1e-6), "eval-mode mismatch vs reference"

    # 2) Explicit multi-block grid (grid=(2,)) to exercise tiling/index maps.
    out_tiled = jax.block_until_ready(
        positional_encoding(token_embedding, pos_embedding,
                            training=False, tile_s=8))
    assert jnp.allclose(out_tiled, ref, atol=1e-6), "tiled mismatch vs reference"

    # 3) Partial trailing tile (S=12 with tile_s=8 -> masked last block).
    S2 = 12
    te2 = token_embedding[:S2]
    ref2 = te2 + pos_embedding[:S2]
    out_part = jax.block_until_ready(
        positional_encoding(te2, pos_embedding, training=False, tile_s=8))
    assert jnp.allclose(out_part, ref2, atol=1e-6), "partial-tile mismatch"

    # 4) Fused TokenEmbedding sqrt(E) scale (as in the Seq2SeqTransformer forward).
    scale = math.sqrt(E)
    out_scaled = jax.block_until_ready(
        positional_encoding(token_embedding, pos_embedding,
                            training=False, emb_scale=scale))
    ref_scaled = token_embedding * scale + pos_embedding[:S]
    assert jnp.allclose(out_scaled, ref_scaled, atol=1e-5, rtol=1e-5), \
        "fused-scale mismatch vs reference"

    # 5) Training/dropout kernel: in-kernel PRNG only lowers on real TPU hardware
    #    (the CPU / interpret fallback has no prng_seed lowering), so gate it.
    if jax.default_backend() == "tpu":
        rate = 0.1
        out_drop = jax.block_until_ready(
            positional_encoding(token_embedding, pos_embedding,
                                dropout_rate=rate, training=True,
                                seed=123, tile_s=8))
        assert out_drop.shape == (S, B, E)
        kept_ref = ref / (1.0 - rate)
        ok = (out_drop == 0) | (jnp.abs(out_drop - kept_ref) < 1e-4)
        assert bool(jnp.all(ok)), "dropout kept-values mismatch vs reference"

    print("KERNEL_OK")
</pallas_src>

<mosaic_0001>
module attributes {stable_mosaic.version = 11 : i64} {
  func.func @_pe_add_kernel(%arg0: i32, %arg1: memref<8x64xf32, #tpu.memory_space<vmem>>, %arg2: memref<8x32xf32, #tpu.memory_space<vmem>>, %arg3: memref<8x64xf32, #tpu.memory_space<vmem>>) attributes {dimension_semantics = [#tpu.dimension_semantics<parallel>], iteration_bounds = array<i64: 2>, scalar_prefetch = 0 : i64, scratch_operands = 0 : i64, tpu.core_type = #tpu.core_type<tc>, window_params = [{transform_indices = @transform_0, window_bounds = array<i64: 8, 64>}, {transform_indices = @transform_1, window_bounds = array<i64: 8, 32>}, {transform_indices = @transform_2, window_bounds = array<i64: 8, 64>}]} {
    %c0 = arith.constant 0 : index
    %c0_0 = arith.constant 0 : index
    %0 = vector.load %arg1[%c0, %c0_0] : memref<8x64xf32, #tpu.memory_space<vmem>>, vector<8x64xf32>
    %c0_1 = arith.constant 0 : index
    %c0_2 = arith.constant 0 : index
    %1 = vector.load %arg2[%c0_1, %c0_2] : memref<8x32xf32, #tpu.memory_space<vmem>>, vector<8x32xf32>
    %2 = tpu.concatenate %1, %1 in 1 : vector<8x32xf32>, vector<8x32xf32> -> vector<8x64xf32>
    %3 = arith.addf %0, %2 : vector<8x64xf32>
    %c0_3 = arith.constant 0 : index
    %c0_4 = arith.constant 0 : index
    %4 = vector.load %arg3[%c0_3, %c0_4] : memref<8x64xf32, #tpu.memory_space<vmem>>, vector<8x64xf32>
    tpu.vector_store %arg3[%c0_3, %c0_4], %3 {strides = array<i32>} : memref<8x64xf32, #tpu.memory_space<vmem>>, vector<8x64xf32>,
    return
  }
  func.func @transform_0(%arg0: i32) -> (i32, i32) {
    %c0_i32 = arith.constant 0 : i32
    %c0_i32_0 = arith.constant 0 : i32
    return %arg0, %c0_i32 : i32, i32
  }
  func.func @transform_1(%arg0: i32) -> (i32, i32) {
    %c0_i32 = arith.constant 0 : i32
    %c0_i32_0 = arith.constant 0 : i32
    return %arg0, %c0_i32 : i32, i32
  }
  func.func @transform_2(%arg0: i32) -> (i32, i32) {
    %c0_i32 = arith.constant 0 : i32
    %c0_i32_0 = arith.constant 0 : i32
    return %arg0, %c0_i32 : i32, i32
  }
}

</mosaic_0001>

<llo_original>
// kernel: tpu_custom_call.1
$region0: #{tpu_custom_call.1}
  #allocation0 [shape = 'u32[]', space=smem, size = 0x4, offset = 0x4, fixed_abs, tag = 'smem constant byte address 0x4 - core index']
  #allocation1 [shape = 'u32[144,128]{1,0:T(1,128)}', space=vmem, size = 0x12000, scoped, tag = 'internal scratch']
  %s0 = inlined_call_operand.hbm [shape: f32[16,64], index: 0, kind: input, shape index: {}]
  %s1 = inlined_call_operand.hbm [shape: f32[16,32], index: 1, kind: input, shape index: {}]
  %s2 = inlined_call_operand.hbm [shape: f32[16,64], index: 2, kind: output, shape index: {}]
  %s3 = sld [smem:[#allocation0]]
  $region49: #{tpu_custom_call.1} parent=0
    _
  %s5 = ssub.s32 1, %s3
  %s6 = scalar_select 0, %s5, %s3
  $region1: #{tpu_custom_call.1} parent=0
    #allocation2 [shape = 'u8[8192]{0}', space=vmem, size = 0x2000, scoped, tag = 'input window, operand 0']
    #allocation3 [shape = 's32[2]{0}', space=sflag, size = 0x8, scoped, tag = 'scoped memory for tpu_custom_call.1']
    #allocation4 [shape = 's32[2]{0}', space=sflag, size = 0x8, scoped, tag = 'scoped memory for tpu_custom_call.1']
    #allocation5 [shape = 'u8[8192]{0}', space=vmem, size = 0x2000, scoped, tag = 'input window, operand 1']
    #allocation6 [shape = 's32[2]{0}', space=sflag, size = 0x8, scoped, tag = 'scoped memory for tpu_custom_call.1']
    #allocation7 [shape = 'u8[8192]{0}', space=vmem, size = 0x2000, scoped, tag = 'output window, operand 0']
    %7 = vsyncpa [#allocation3], 0
    %s8 = scalar_lea.sflag [#allocation3], 1
    %9 = vsyncpa %s8, 0
    %10 = vsyncpa [#allocation6], 0
    %s11 = scalar_lea.sflag [#allocation6], 1
    %12 = vsyncpa %s11, 0
    %13 = vsyncpa [#allocation4], 0
    %s14 = scalar_lea.sflag [#allocation4], 1
    %15 = vsyncpa %s14, 0
    loop: start=0, step=1, limit=4
    $region2: #{tpu_custom_call.1} parent=1 // loop_pre_header
      _
    $region3: #{tpu_custom_call.1} parent=1 // loop_header
      %s17 = sphi 0, %s21
      %p18 = scmp.ge.s32.totalorder %s17, 4
      %s27 = sphi 0, %s29
      %s30 = sphi 0, %s27
      %s31 = sphi 0, %s30
      %s47 = sphi 0, %s31
      %s53 = sphi 0, %s55
      %s56 = sphi 0, %s53
      %s57 = sphi 0, %s56
      %s73 = sphi 0, %s57
      %s79 = sphi 0, %s81
      %s82 = sphi 0, %s79
      %s83 = sphi 0, %s82
      %s99 = sphi 0, %s83
    $region4: #{tpu_custom_call.1} parent=1 // loop_header_branch
      %20 = sbr.rel (%p18) target = $region8
    $region5: #{tpu_custom_call.1} parent=1 // loop_body
      %s22 = ssub.s32 %s17, 1
      %s23 = ssub.s32 %s17, 2
      %s24 = sadd.s32 %s17, 1
      %s25 = ssub.s32 %s17, %s24
      %p26 = scmp.eq.s32.totalorder %s25, 0
      %s28 = sadd.s32 %s27, 1
      %s29 = scalar_select %p26, %s27, %s28
      %p32 = pneg %p26
      %p33 = scmp.eq.s32.totalorder %s17, 1
      %p34 = por %p32, %p33
      %p35 = scmp.ne.s32.totalorder %s27, %s30
      %p36 = scmp.eq.s32.totalorder %s17, 0
      %p37 = por %p35, %p36
      %p38 = scmp.ne.s32.totalorder %s27, %s30
      %p39 = scmp.eq.s32.totalorder %s22, 1
      %p40 = por %p38, %p39
      %p41 = scmp.ne.s32.totalorder %s30, %s31
      %p42 = scmp.eq.s32.totalorder %s22, 0
      %p43 = por %p41, %p42
      %p44 = scmp.ne.s32.totalorder %s30, %s31
      %p45 = scmp.eq.s32.totalorder %s23, 1
      %p46 = por %p44, %p45
      %p48 = scmp.ne.s32.totalorder %s31, %s47
      %p49 = scmp.eq.s32.totalorder %s23, 0
      %p50 = por %p48, %p49
      %s51 = ssub.s32 %s17, %s24
      %p52 = scmp.eq.s32.totalorder %s51, 0
      %s54 = sadd.s32 %s53, 1
      %s55 = scalar_select %p52, %s53, %s54
      %p58 = pneg %p52
      %p59 = scmp.eq.s32.totalorder %s17, 1
      %p60 = por %p58, %p59
      %p61 = scmp.ne.s32.totalorder %s53, %s56
      %p62 = scmp.eq.s32.totalorder %s17, 0
      %p63 = por %p61, %p62
      %p64 = scmp.ne.s32.totalorder %s53, %s56
      %p65 = scmp.eq.s32.totalorder %s22, 1
      %p66 = por %p64, %p65
      %p67 = scmp.ne.s32.totalorder %s56, %s57
      %p68 = scmp.eq.s32.totalorder %s22, 0
      %p69 = por %p67, %p68
      %p70 = scmp.ne.s32.totalorder %s56, %s57
      %p71 = scmp.eq.s32.totalorder %s23, 1
      %p72 = por %p70, %p71
      %p74 = scmp.ne.s32.totalorder %s57, %s73
      %p75 = scmp.eq.s32.totalorder %s23, 0
      %p76 = por %p74, %p75
      %s77 = ssub.s32 %s17, %s24
      %p78 = scmp.eq.s32.totalorder %s77, 0
      %s80 = sadd.s32 %s79, 1
      %s81 = scalar_select %p78, %s79, %s80
      %p84 = pneg %p78
      %p85 = scmp.eq.s32.totalorder %s17, 1
      %p86 = por %p84, %p85
      %p87 = scmp.ne.s32.totalorder %s79, %s82
      %p88 = scmp.eq.s32.totalorder %s17, 0
      %p89 = por %p87, %p88
      %p90 = scmp.ne.s32.totalorder %s79, %s82
      %p91 = scmp.eq.s32.totalorder %s22, 1
      %p92 = por %p90, %p91
      %p93 = scmp.ne.s32.totalorder %s82, %s83
      %p94 = scmp.eq.s32.totalorder %s22, 0
      %p95 = por %p93, %p94
      %p96 = scmp.ne.s32.totalorder %s82, %s83
      %p97 = scmp.eq.s32.totalorder %s23, 1
      %p98 = por %p96, %p97
      %p100 = scmp.ne.s32.totalorder %s83, %s99
      %p101 = scmp.eq.s32.totalorder %s23, 0
      %p102 = por %p100, %p101
      %p103 = scmp.le.s32.totalorder 1, %s17
      %p104 = scmp.lt.s32.totalorder %s17, 3
      %p105 = pnand %p103, %p104
      %p106 = pneg %p105
      // Predicated region
      $region9: #{tpu_custom_call.1} parent=5 // pred_check
        _
      $region10: #{tpu_custom_call.1} parent=5 // pred_check_branch
        %108 = sbr.rel (%p105) target = $region12
      $region11: #{tpu_custom_call.1} parent=5 // pred_region
        %s109 = ssub.s32 %s17, 1
      $region12: #{tpu_custom_call.1} parent=5 // pred_fallthru
        _
      %p110 = scmp.lt.s32.totalorder %s17, 2
      // Predicated region
      $region13: #{tpu_custom_call.1} parent=5 // pred_check
        %p111 = pneg %p110
      $region14: #{tpu_custom_call.1} parent=5 // pred_check_branch
        %113 = sbr.rel (%p111) target = $region16
      $region15: #{tpu_custom_call.1} parent=5 // pred_region
        // Predicated region
        $region17: #{tpu_custom_call.1} parent=15 // pred_check
          %p114 = pneg %p37
        $region18: #{tpu_custom_call.1} parent=15 // pred_check_branch
          %116 = sbr.rel (%p114) target = $region20
        $region19: #{tpu_custom_call.1} parent=15 // pred_region
          %s117 = sand.u32 %s27, 1
          %s118 = scalar_lea.sflag [#allocation3], %s117
          %s119 = sand.u32 %s27, 1
          %s120 = smul.addr %s119, 8
          %s121 = scalar_lea.vmem [#allocation2], %s120
          %s123 = ssub.s32 128, 128
          %124 = vsyncadd %s118, %s123
          %s125 = smul.addr %s17, 128
          %s126 = scalar_lea.hbm %s0, %s125
          %s128 = sshll.u32 %s121, 4
          %s129 = int_to_ptr.vmem [resolvable:$true] %s128
          %131 = dma.hbm_to_vmem [thread:$0]  %s126, 128, %s129, %s118
        $region20: #{tpu_custom_call.1} parent=15 // pred_fallthru
          _
        // Predicated region
        $region21: #{tpu_custom_call.1} parent=15 // pred_check
          %p132 = pneg %p63
        $region22: #{tpu_custom_call.1} parent=15 // pred_check_branch
          %134 = sbr.rel (%p132) target = $region24
        $region23: #{tpu_custom_call.1} parent=15 // pred_region
          %s135 = sand.u32 %s53, 1
          %s136 = scalar_lea.sflag [#allocation6], %s135
          %s137 = sand.u32 %s53, 1
          %s138 = smul.addr %s137, 8
          %s139 = scalar_lea.vmem [#allocation5], %s138
          %s141 = ssub.s32 128, 128
          %142 = vsyncadd %s136, %s141
          %s143 = smul.addr %s17, 128
          %s144 = scalar_lea.hbm %s1, %s143
          %s146 = sshll.u32 %s139, 4
          %s147 = int_to_ptr.vmem [resolvable:$true] %s146
          %149 = dma.hbm_to_vmem [thread:$0]  %s144, 128, %s147, %s136
        $region24: #{tpu_custom_call.1} parent=15 // pred_fallthru
          _
      $region16: #{tpu_custom_call.1} parent=5 // pred_fallthru
        _
      %p150 = scmp.le.s32.totalorder 1, %s17
      %p151 = scmp.lt.s32.totalorder %s17, 3
      %p152 = pnand %p150, %p151
      %p153 = pneg %p152
      // Predicated region
      $region25: #{tpu_custom_call.1} parent=5 // pred_check
        _
      $region26: #{tpu_custom_call.1} parent=5 // pred_check_branch
        %155 = sbr.rel (%p152) target = $region28
      $region27: #{tpu_custom_call.1} parent=5 // pred_region
        %s156 = ssub.s32 %s17, 1
        %s157 = sand.u32 %s30, 1
        %s158 = scalar_lea.sflag [#allocation3], %s157
        %s159 = sand.u32 %s30, 1
        %s160 = smul.addr %s159, 8
        %s161 = scalar_lea.vmem [#allocation2], %s160
        // Predicated region
        $region29: #{tpu_custom_call.1} parent=27 // pred_check
          %p162 = pneg %p43
        $region30: #{tpu_custom_call.1} parent=27 // pred_check_branch
          %164 = sbr.rel (%p162) target = $region32
        $region31: #{tpu_custom_call.1} parent=27 // pred_region
          %165 = dma.done %s158, 128
        $region32: #{tpu_custom_call.1} parent=27 // pred_fallthru
          _
        %s166 = sand.u32 %s56, 1
        %s167 = scalar_lea.sflag [#allocation6], %s166
        %s168 = sand.u32 %s56, 1
        %s169 = smul.addr %s168, 8
        %s170 = scalar_lea.vmem [#allocation5], %s169
        // Predicated region
        $region33: #{tpu_custom_call.1} parent=27 // pred_check
          %p171 = pneg %p69
        $region34: #{tpu_custom_call.1} parent=27 // pred_check_branch
          %173 = sbr.rel (%p171) target = $region36
        $region35: #{tpu_custom_call.1} parent=27 // pred_region
          %174 = dma.done %s167, 128
        $region36: #{tpu_custom_call.1} parent=27 // pred_fallthru
          _
        %s175 = sand.u32 %s30, 1
        %s176 = scalar_lea.sflag [#allocation3], %s175
        %s177 = sand.u32 %s30, 1
        %s178 = smul.addr %s177, 8
        %s179 = scalar_lea.vmem [#allocation2], %s178
        %p180 = pneg %p43
        %p181 = pneg %p40
        %s182 = sand.u32 %s56, 1
        %s183 = scalar_lea.sflag [#allocation6], %s182
        %s184 = sand.u32 %s56, 1
        %s185 = smul.addr %s184, 8
        %s186 = scalar_lea.vmem [#allocation5], %s185
        %p187 = pneg %p69
        %p188 = pneg %p66
        %p189 = pneg %p95
        %p190 = pneg %p92
        %s191 = sand.u32 %s82, 1
        %s192 = scalar_lea.sflag [#allocation4], %s191
        %s193 = sand.u32 %s82, 1
        %s194 = smul.addr %s193, 8
        %s195 = scalar_lea.vmem [#allocation7], %s194
        %v196 = vld [vmem:[%s161] sm:$0xff]
        %v197 = vld [vmem:[%s170] sm:$0xff]
        %199 = vrot.lane.b32.xlu0 %v197, 32
        %v200 = vpop.permute.xlu0 %199
        %vm202 = vcmask 261120
        %v203 = vsel %vm202, %v197, %v200
        %v204 = vadd.f32 %v196, %v203
        %vm205 = vcmask 523264
        %206 = vst.msk [vmem:[%s195] sm:$0xff] %vm205, %v204
        %s207 = sand.u32 %s82, 1
        %s208 = scalar_lea.sflag [#allocation4], %s207
        %s209 = sand.u32 %s82, 1
        %s210 = smul.addr %s209, 8
        %s211 = scalar_lea.vmem [#allocation7], %s210
        // Predicated region
        $region37: #{tpu_custom_call.1} parent=27 // pred_check
          %p212 = pneg %p92
        $region38: #{tpu_custom_call.1} parent=27 // pred_check_branch
          %214 = sbr.rel (%p212) target = $region40
        $region39: #{tpu_custom_call.1} parent=27 // pred_region
          %s216 = ssub.s32 128, 128
          %217 = vsyncadd %s208, %s216
          %s218 = smul.addr %s22, 128
          %s219 = scalar_lea.hbm %s2, %s218
          %s221 = sshll.u32 %s211, 4
          %s222 = int_to_ptr.vmem [resolvable:$true] %s221
          %224 = dma.vmem_to_hbm [thread:$0]  %s222, 128, %s219, %s208
        $region40: #{tpu_custom_call.1} parent=27 // pred_fallthru
          _
      $region28: #{tpu_custom_call.1} parent=5 // pred_fallthru
        _
      %p225 = scmp.le.s32.totalorder 2, %s17
      // Predicated region
      $region41: #{tpu_custom_call.1} parent=5 // pred_check
        %p226 = pneg %p225
      $region42: #{tpu_custom_call.1} parent=5 // pred_check_branch
        %228 = sbr.rel (%p226) target = $region44
      $region43: #{tpu_custom_call.1} parent=5 // pred_region
        %s229 = ssub.s32 %s17, 2
        // Predicated region
        $region45: #{tpu_custom_call.1} parent=43 // pred_check
          %p230 = pneg %p98
        $region46: #{tpu_custom_call.1} parent=43 // pred_check_branch
          %232 = sbr.rel (%p230) target = $region48
        $region47: #{tpu_custom_call.1} parent=43 // pred_region
          %s233 = sand.u32 %s83, 1
          %s234 = scalar_lea.sflag [#allocation4], %s233
          %s235 = sand.u32 %s83, 1
          %s236 = smul.addr %s235, 8
          %s237 = scalar_lea.vmem [#allocation7], %s236
          %238 = dma.done %s234, 128
        $region48: #{tpu_custom_call.1} parent=43 // pred_fallthru
          _
      $region44: #{tpu_custom_call.1} parent=5 // pred_fallthru
        _
    $region6: #{tpu_custom_call.1} parent=1 // loop_footer
      %s21 = sadd.s32 1, %s17
    $region7: #{tpu_custom_call.1} parent=1 // loop_footer_branch
      %16 = sbr.rel target = $region3
    $region8: #{tpu_custom_call.1} parent=1 // loop_exit
      _
    %239 = vsyncpa [#allocation3], 1
    %s240 = scalar_lea.sflag [#allocation3], 1
    %241 = vsyncpa %s240, 1
    %242 = vsyncpa [#allocation6], 1
    %s243 = scalar_lea.sflag [#allocation6], 1
    %244 = vsyncpa %s243, 1
    %245 = vsyncpa [#allocation4], 1
    %s246 = scalar_lea.sflag [#allocation4], 1
    %247 = vsyncpa %s246, 1

</llo_original>
